<compile_context>
chip_gen: v5e
topology: v5e:2x2
jax: 0.10.0
libtpu: 0.0.40
codegen_flags: <defaults>
</compile_context>

<pallas_src>
import functools

import jax
import jax.numpy as jnp
from jax.experimental import pallas as pl
from jax.experimental.pallas import tpu as pltpu


def _fused_mha_kernel(xq_ref, xkv_ref, wq_ref, wkv_ref, wproj_ref, bproj_ref,
                      o_ref, kv_ref, q_ref, att_ref, *,
                      n_head, head_dim, exact_recip):
    """Fused multi-head causal attention + output projection.

    Grid: (batch, query-tile).  Per step:
      xq_ref   : (1, Tq, C)   query rows of this tile
      xkv_ref  : (1, T,  C)   full sequence (re-DMA'd only when b changes)
      wq_ref   : (C, H*D)     Wq packed head-major, 1/sqrt(D) pre-folded
      wkv_ref  : (C, 2*H*D)   [Wk | Wv] packed head-major
      wproj_ref: (H*D, C)     output projection weight (right-mul layout)
      bproj_ref: (1, C)       output projection bias (f32)
      o_ref    : (1, Tq, C)   output tile
      kv_ref   : (T, 2*H*D)   VMEM scratch — K/V cache for this batch row
      q_ref    : (Tq, H*D)    VMEM scratch — Q for this tile
      att_ref  : (Tq, H*D)    VMEM scratch — per-head context accumulator
    """
    qi = pl.program_id(1)
    T = xkv_ref.shape[1]
    Tq = xq_ref.shape[1]
    HD = n_head * head_dim
    cdt = kv_ref.dtype                       # compute dtype (bf16 by default)

    # --- K/V projection for the whole sequence: once per batch row, cached
    #     in VMEM scratch for all query tiles of this batch.
    @pl.when(qi == 0)
    def _():
        kv = jnp.dot(xkv_ref[0], wkv_ref[...],
                     preferred_element_type=jnp.float32)           # (T, 2HD)
        kv_ref[...] = kv.astype(cdt)

    # --- Q projection for this query tile (scale already folded into Wq);
    #     single cast into scratch bounds the live range of the f32 value.
    q = jnp.dot(xq_ref[0], wq_ref[...],
                preferred_element_type=jnp.float32)                # (Tq, HD)
    q_ref[...] = q.astype(cdt)

    # --- causal mask for this query tile (global row offset qi*Tq).  Large
    #     finite negative instead of -inf so padded rows can't NaN.
    q_off = qi * Tq
    row = q_off + jax.lax.broadcasted_iota(jnp.int32, (Tq, T), 0)
    col = jax.lax.broadcasted_iota(jnp.int32, (Tq, T), 1)
    causal = row >= col
    neg_big = jnp.float32(-1e30)

    # --- per-head attention.  Static unroll (H is small); each head writes
    #     its (Tq, D) context straight into the scratch accumulator, so no
    #     list/concat keeps H tiles live at once.
    for h in range(n_head):
        lo = h * head_dim
        hi = lo + head_dim
        qh = q_ref[:, lo:hi]                                       # (Tq, D)
        kh = kv_ref[:, lo:hi]                                      # (T, D)
        vh = kv_ref[:, HD + lo:HD + hi]                            # (T, D)

        # q @ k^T with the transpose folded into the contraction.
        s = jax.lax.dot_general(
            qh, kh,
            dimension_numbers=(((1,), (1,)), ((), ())),
            preferred_element_type=jnp.float32)                    # (Tq, T)
        s = jnp.where(causal, s, neg_big)

        # numerically-stable softmax
        m = jnp.max(s, axis=-1, keepdims=True)
        e = jnp.exp(s - m)
        denom = jnp.sum(e, axis=-1, keepdims=True)
        if exact_recip:
            p = (e / denom).astype(cdt)
        else:
            p = (e * pl.reciprocal(denom, approx=True)).astype(cdt)

        ctx = jnp.dot(p, vh, preferred_element_type=jnp.float32)   # (Tq, D)
        att_ref[:, lo:hi] = ctx.astype(cdt)

    # --- fused output projection + bias, lane-dense (1, Tq, C) store.
    y = jnp.dot(att_ref[...], wproj_ref[...],
                preferred_element_type=jnp.float32)                # (Tq, C)
    o_ref[0] = (y + bproj_ref[...]).astype(o_ref.dtype)


def _vmem_limit_bytes(T, Tq, C, HD, compute_dtype, out_dtype):
    """Explicit scoped-VMEM budget sized from the actual per-step residency."""
    cb = jnp.dtype(compute_dtype).itemsize
    ob = jnp.dtype(out_dtype).itemsize
    weights = (C * HD + C * 2 * HD + HD * C) * cb + C * 4      # single-buffered
    io = 2 * Tq * C * cb + 2 * T * C * cb + 2 * Tq * C * ob    # double-buffered
    scratch = (T * 2 * HD + 2 * Tq * HD) * cb
    transient = 4 * Tq * T * 4 + (Tq * HD + T * 2 * HD) * 4    # f32 score/exp + pre-cast matmul results
    total = weights + io + scratch + transient
    total = int(total * 1.5) + (4 << 20)                       # compiler scratch headroom
    # Clamp to 64 MiB so the budget is also valid under v7x's physical VMEM.
    return max(8 << 20, min(total, 64 << 20))


def multi_head_attention(x, wq, wk, wv, w_proj, b_proj, *,
                         compute_dtype=jnp.bfloat16, out_dtype=None,
                         q_tile=256, exact_softmax_reciprocal=False):
    """x: (B, T, C); wq/wk/wv: (H, C, D); w_proj: (H*D, C); b_proj: (C,).

    compute_dtype : dtype fed to the MXU (default bf16 on ALL generations —
                    the MXU is bf16-native everywhere; accumulation stays f32).
    out_dtype     : dtype of the kernel output (defaults to x.dtype).
    q_tile        : query rows per grid step; keep >= 256 on v6e/v7x,
                    >= 128 on v5e.  Shrunk to T automatically when T is small.
    exact_softmax_reciprocal : use exact divide instead of the EUP approx
                    reciprocal (for tight numerical parity checks / training).

    NOTE: real configurations should keep C and 3*H*D multiples of 128 and T a
    multiple of 8 (16 for bf16) so the output store and the QKV matmuls stay
    lane-dense; GPT-2 shapes (C=768, D=64) comply.  The toy test below does not.
    """
    B, T, C = x.shape
    H, _, D = wq.shape
    HD = H * D

    if out_dtype is None:
        out_dtype = x.dtype

    # Query-tile size: must divide T and satisfy the (8, 128) block rule
    # (second-minor divisible by 8, or equal to the full dim).
    Tq = min(q_tile, T)
    if T % Tq != 0 or (Tq % 8 != 0 and Tq != T):
        Tq = T
    num_q = T // Tq

    # --- one-time weight prep in the wrapper (not on the hot path) ---------
    def _pack(w):                            # (H, C, D) -> (C, H*D), head-major
        return jnp.transpose(w, (1, 0, 2)).reshape(C, HD)

    scale = jnp.float32(D) ** -0.5
    wq_packed = (_pack(wq).astype(jnp.float32) * scale).astype(compute_dtype)
    wkv_packed = jnp.concatenate([_pack(wk), _pack(wv)], axis=1).astype(compute_dtype)
    wproj_c = w_proj.astype(compute_dtype)
    bproj_2d = b_proj.reshape(1, C).astype(jnp.float32)
    x_c = x.astype(compute_dtype)

    kernel = functools.partial(_fused_mha_kernel, n_head=H, head_dim=D,
                               exact_recip=exact_softmax_reciprocal)

    # Weights never change across grid steps -> single-buffer them.
    const_weight = functools.partial(pl.BlockSpec,
                                     pipeline_mode=pl.Buffered(1))

    return pl.pallas_call(
        kernel,
        out_shape=jax.ShapeDtypeStruct((B, T, C), out_dtype),
        grid_spec=pltpu.PrefetchScalarGridSpec(
            num_scalar_prefetch=0,
            grid=(B, num_q),
            in_specs=[
                # query rows of this tile
                pl.BlockSpec((1, Tq, C), lambda b, qi: (b, qi, 0)),
                # full sequence for K/V (block index constant in qi -> the
                # pipeline only re-DMAs it when b changes)
                pl.BlockSpec((1, T, C), lambda b, qi: (b, 0, 0)),
                const_weight((C, HD), lambda b, qi: (0, 0)),
                const_weight((C, 2 * HD), lambda b, qi: (0, 0)),
                const_weight((HD, C), lambda b, qi: (0, 0)),
                const_weight((1, C), lambda b, qi: (0, 0)),
            ],
            out_specs=pl.BlockSpec((1, Tq, C), lambda b, qi: (b, qi, 0)),
            scratch_shapes=[
                pltpu.VMEM((T, 2 * HD), compute_dtype),   # K/V cache
                pltpu.VMEM((Tq, HD), compute_dtype),      # Q tile
                pltpu.VMEM((Tq, HD), compute_dtype),      # per-head context acc
            ],
        ),
        compiler_params=pltpu.CompilerParams(
            # Batch axis is parallel (megacore); the query-tile axis is
            # "arbitrary" because K/V are cached in scratch across query tiles
            # of the same batch row.
            dimension_semantics=("parallel", "arbitrary"),
            vmem_limit_bytes=_vmem_limit_bytes(T, Tq, C, HD,
                                               compute_dtype, out_dtype),
        ),
    )(x_c, x_c, wq_packed, wkv_packed, wproj_c, bproj_2d)


def reference_mha(x, wq, wk, wv, w_proj, b_proj):
    """Pure-JAX reference matching the PyTorch module (eval mode)."""
    B, T, C = x.shape
    H, _, D = wq.shape
    outs = []
    for h in range(H):
        q = x @ wq[h]
        k = x @ wk[h]
        v = x @ wv[h]
        wei = (q @ jnp.swapaxes(k, -2, -1)) * (D ** -0.5)
        mask = jnp.tril(jnp.ones((T, T)))
        wei = jnp.where(mask == 0, -jnp.inf, wei)
        wei = jax.nn.softmax(wei, axis=-1)
        outs.append(wei @ v)
    cat = jnp.concatenate(outs, axis=-1)
    return cat @ w_proj + b_proj


if __name__ == "__main__":
    # Small config: n_embed=32, n_head=4, head_size=8, block_size>=8, dropout=0.0
    B, T, C = 2, 8, 32
    H, D = 4, 8

    key = jax.random.PRNGKey(0)
    kx, kq, kk, kv, kp, kb = jax.random.split(key, 6)

    x = jax.random.normal(kx, (B, T, C), dtype=jnp.float32)
    # Per-head Linear(C -> D, bias=False): weights stacked as (H, C, D)
    wq = jax.random.normal(kq, (H, C, D), dtype=jnp.float32) * 0.02
    wk = jax.random.normal(kk, (H, C, D), dtype=jnp.float32) * 0.02
    wv = jax.random.normal(kv, (H, C, D), dtype=jnp.float32) * 0.02
    # Output projection Linear(H*D -> C), stored transposed as (H*D, C)
    w_proj = jax.random.normal(kp, (H * D, C), dtype=jnp.float32) * 0.02
    b_proj = jax.random.normal(kb, (C,), dtype=jnp.float32) * 0.02

    ref = reference_mha(x, wq, wk, wv, w_proj, b_proj)

    # Default path: bf16 MXU inputs, f32 accumulation, approx softmax recip.
    out_bf16 = multi_head_attention(x, wq, wk, wv, w_proj, b_proj)
    out_bf16 = jax.block_until_ready(out_bf16)
    assert out_bf16.shape == (B, T, C), out_bf16.shape
    err_bf16 = float(jnp.max(jnp.abs(out_bf16 - ref)))
    assert jnp.allclose(out_bf16, ref, atol=2e-2, rtol=2e-2), err_bf16

    # f32 parity path with exact softmax divide (tight tolerance).
    out_f32 = multi_head_attention(x, wq, wk, wv, w_proj, b_proj,
                                   compute_dtype=jnp.float32,
                                   exact_softmax_reciprocal=True)
    out_f32 = jax.block_until_ready(out_f32)
    err_f32 = float(jnp.max(jnp.abs(out_f32 - ref)))
    assert jnp.allclose(out_f32, ref, atol=1e-3, rtol=1e-3), err_f32

    print("KERNEL_OK")
</pallas_src>

<mosaic_0001>
module attributes {stable_mosaic.version = 11 : i64} {
  func.func @_fused_mha_kernel(%arg0: i32, %arg1: i32, %arg2: memref<1x8x32xbf16, #tpu.memory_space<vmem>>, %arg3: memref<1x8x32xbf16, #tpu.memory_space<vmem>>, %arg4: memref<32x32xbf16, #tpu.memory_space<vmem>>, %arg5: memref<32x64xbf16, #tpu.memory_space<vmem>>, %arg6: memref<32x32xbf16, #tpu.memory_space<vmem>>, %arg7: memref<1x32xf32, #tpu.memory_space<vmem>>, %arg8: memref<1x8x32xf32, #tpu.memory_space<vmem>>, %arg9: memref<8x64xbf16, #tpu.memory_space<vmem>>, %arg10: memref<8x32xbf16, #tpu.memory_space<vmem>>, %arg11: memref<8x32xbf16, #tpu.memory_space<vmem>>) attributes {dimension_semantics = [#tpu.dimension_semantics<parallel>, #tpu.dimension_semantics<arbitrary>], iteration_bounds = array<i64: 2, 1>, scalar_prefetch = 0 : i64, scratch_operands = 3 : i64, tpu.core_type = #tpu.core_type<tc>, window_params = [{transform_indices = @transform_0, window_bounds = array<i64: 1, 8, 32>}, {transform_indices = @transform_1, window_bounds = array<i64: 1, 8, 32>}, {pipeline_mode = #tpu.pipeline_mode<synchronous>, transform_indices = @transform_2, window_bounds = array<i64: 32, 32>}, {pipeline_mode = #tpu.pipeline_mode<synchronous>, transform_indices = @transform_3, window_bounds = array<i64: 32, 64>}, {pipeline_mode = #tpu.pipeline_mode<synchronous>, transform_indices = @transform_4, window_bounds = array<i64: 32, 32>}, {pipeline_mode = #tpu.pipeline_mode<synchronous>, transform_indices = @transform_5, window_bounds = array<i64: 1, 32>}, {transform_indices = @transform_6, window_bounds = array<i64: 1, 8, 32>}]} {
    %c0_i32 = arith.constant 0 : i32
    %0 = arith.cmpi eq, %arg1, %c0_i32 : i32
    %1 = arith.extui %0 : i1 to i32
    %c0_i32_0 = arith.constant 0 : i32
    %2 = arith.cmpi ne, %1, %c0_i32_0 : i32
    scf.if %2 {
      %c0_62 = arith.constant 0 : index
      %c0_63 = arith.constant 0 : index
      %c0_64 = arith.constant 0 : index
      %104 = vector.load %arg3[%c0_62, %c0_63, %c0_64] : memref<1x8x32xbf16, #tpu.memory_space<vmem>>, vector<1x8x32xbf16>
      %105 = vector.shape_cast %104 : vector<1x8x32xbf16> to vector<8x32xbf16>
      %c0_65 = arith.constant 0 : index
      %c0_66 = arith.constant 0 : index
      %106 = vector.load %arg5[%c0_65, %c0_66] : memref<32x64xbf16, #tpu.memory_space<vmem>>, vector<32x64xbf16>
      %cst_67 = arith.constant dense<0.000000e+00> : vector<8x64xf32>
      %107 = tpu.matmul %105, %106, %cst_67 {dimension_numbers = #tpu.dot_dimension_numbers<[1], [0], [0], [1], [0, 0, 1, 1], [], []>} : vector<8x32xbf16>, vector<32x64xbf16>, vector<8x64xf32> -> vector<8x64xf32>
      %108 = arith.truncf %107 : vector<8x64xf32> to vector<8x64xbf16>
      %c0_68 = arith.constant 0 : index
      %c0_69 = arith.constant 0 : index
      %109 = vector.load %arg9[%c0_68, %c0_69] : memref<8x64xbf16, #tpu.memory_space<vmem>>, vector<8x64xbf16>
      tpu.vector_store %arg9[%c0_68, %c0_69], %108 {strides = array<i32>} : memref<8x64xbf16, #tpu.memory_space<vmem>>, vector<8x64xbf16>,
    } else {
    }
    %c0 = arith.constant 0 : index
    %c0_1 = arith.constant 0 : index
    %c0_2 = arith.constant 0 : index
    %3 = vector.load %arg2[%c0, %c0_1, %c0_2] : memref<1x8x32xbf16, #tpu.memory_space<vmem>>, vector<1x8x32xbf16>
    %4 = vector.shape_cast %3 : vector<1x8x32xbf16> to vector<8x32xbf16>
    %c0_3 = arith.constant 0 : index
    %c0_4 = arith.constant 0 : index
    %5 = vector.load %arg4[%c0_3, %c0_4] : memref<32x32xbf16, #tpu.memory_space<vmem>>, vector<32x32xbf16>
    %cst = arith.constant dense<0.000000e+00> : vector<8x32xf32>
    %6 = tpu.matmul %4, %5, %cst {dimension_numbers = #tpu.dot_dimension_numbers<[1], [0], [0], [1], [0, 0, 1, 1], [], []>} : vector<8x32xbf16>, vector<32x32xbf16>, vector<8x32xf32> -> vector<8x32xf32>
    %7 = arith.truncf %6 : vector<8x32xf32> to vector<8x32xbf16>
    %c0_5 = arith.constant 0 : index
    %c0_6 = arith.constant 0 : index
    %8 = vector.load %arg10[%c0_5, %c0_6] : memref<8x32xbf16, #tpu.memory_space<vmem>>, vector<8x32xbf16>
    tpu.vector_store %arg10[%c0_5, %c0_6], %7 {strides = array<i32>} : memref<8x32xbf16, #tpu.memory_space<vmem>>, vector<8x32xbf16>,
    %c8_i32 = arith.constant 8 : i32
    %9 = arith.muli %arg1, %c8_i32 : i32
    %10 = tpu.iota {dimensions = array<i32: 0>} : vector<8x8xi32>
    %11 = vector.broadcast %9 : i32 to vector<8x8xi32>
    %12 = arith.addi %11, %10 : vector<8x8xi32>
    %13 = tpu.iota {dimensions = array<i32: 1>} : vector<8x8xi32>
    %14 = arith.cmpi sge, %12, %13 : vector<8x8xi32>
    %c0_7 = arith.constant 0 : index
    %c0_8 = arith.constant 0 : index
    %15 = vector.load %arg10[%c0_7, %c0_8] : memref<8x32xbf16, #tpu.memory_space<vmem>>, vector<8x8xbf16>
    %c0_9 = arith.constant 0 : index
    %c0_10 = arith.constant 0 : index
    %16 = vector.load %arg9[%c0_9, %c0_10] : memref<8x64xbf16, #tpu.memory_space<vmem>>, vector<8x8xbf16>
    %c0_11 = arith.constant 0 : index
    %c32 = arith.constant 32 : index
    %17 = vector.load %arg9[%c0_11, %c32] : memref<8x64xbf16, #tpu.memory_space<vmem>>, vector<8x8xbf16>
    %cst_12 = arith.constant dense<0.000000e+00> : vector<8x8xf32>
    %18 = tpu.matmul %15, %16, %cst_12 {dimension_numbers = #tpu.dot_dimension_numbers<[1], [1], [0], [0], [0, 0, 1, 0], [], []>} : vector<8x8xbf16>, vector<8x8xbf16>, vector<8x8xf32> -> vector<8x8xf32>
    %cst_13 = arith.constant -1.000000e+30 : f32
    %19 = vector.broadcast %cst_13 : f32 to vector<8x8xf32>
    %20 = arith.select %14, %18, %19 : vector<8x8xi1>, vector<8x8xf32>
    %cst_14 = arith.constant dense<0xFF800000> : vector<8xf32>
    %21 = vector.multi_reduction <maximumf>, %20, %cst_14 [1] : vector<8x8xf32> to vector<8xf32>
    %22 = vector.shape_cast %21 : vector<8xf32> to vector<8x1xf32>
    %23 = vector.broadcast %22 : vector<8x1xf32> to vector<8x8xf32>
    %24 = arith.subf %20, %23 : vector<8x8xf32>
    %25 = math.exp %24 : vector<8x8xf32>
    %cst_15 = arith.constant dense<0.000000e+00> : vector<8xf32>
    %26 = vector.multi_reduction <add>, %25, %cst_15 [1] : vector<8x8xf32> to vector<8xf32>
    %27 = vector.shape_cast %26 : vector<8xf32> to vector<8x1xf32>
    %28 = tpu.reciprocal %27 {approx = true} : vector<8x1xf32> -> vector<8x1xf32>
    %29 = vector.broadcast %28 : vector<8x1xf32> to vector<8x8xf32>
    %30 = arith.mulf %25, %29 : vector<8x8xf32>
    %31 = arith.truncf %30 : vector<8x8xf32> to vector<8x8xbf16>
    %cst_16 = arith.constant dense<0.000000e+00> : vector<8x8xf32>
    %32 = tpu.matmul %31, %17, %cst_16 {dimension_numbers = #tpu.dot_dimension_numbers<[1], [0], [0], [1], [0, 0, 1, 1], [], []>} : vector<8x8xbf16>, vector<8x8xbf16>, vector<8x8xf32> -> vector<8x8xf32>
    %33 = arith.truncf %32 : vector<8x8xf32> to vector<8x8xbf16>
    %c0_17 = arith.constant 0 : index
    %c0_18 = arith.constant 0 : index
    %34 = vector.load %arg11[%c0_17, %c0_18] : memref<8x32xbf16, #tpu.memory_space<vmem>>, vector<8x8xbf16>
    tpu.vector_store %arg11[%c0_17, %c0_18], %33 {strides = array<i32>} : memref<8x32xbf16, #tpu.memory_space<vmem>>, vector<8x8xbf16>,
    %c0_19 = arith.constant 0 : index
    %c8 = arith.constant 8 : index
    %35 = vector.load %arg10[%c0_19, %c8] : memref<8x32xbf16, #tpu.memory_space<vmem>>, vector<8x8xbf16>
    %c0_20 = arith.constant 0 : index
    %c8_21 = arith.constant 8 : index
    %36 = vector.load %arg9[%c0_20, %c8_21] : memref<8x64xbf16, #tpu.memory_space<vmem>>, vector<8x8xbf16>
    %c0_22 = arith.constant 0 : index
    %c40 = arith.constant 40 : index
    %37 = vector.load %arg9[%c0_22, %c40] : memref<8x64xbf16, #tpu.memory_space<vmem>>, vector<8x8xbf16>
    %cst_23 = arith.constant dense<0.000000e+00> : vector<8x8xf32>
    %38 = tpu.matmul %35, %36, %cst_23 {dimension_numbers = #tpu.dot_dimension_numbers<[1], [1], [0], [0], [0, 0, 1, 0], [], []>} : vector<8x8xbf16>, vector<8x8xbf16>, vector<8x8xf32> -> vector<8x8xf32>
    %cst_24 = arith.constant -1.000000e+30 : f32
    %39 = vector.broadcast %cst_24 : f32 to vector<8x8xf32>
    %40 = arith.select %14, %38, %39 : vector<8x8xi1>, vector<8x8xf32>
    %cst_25 = arith.constant dense<0xFF800000> : vector<8xf32>
    %41 = vector.multi_reduction <maximumf>, %40, %cst_25 [1] : vector<8x8xf32> to vector<8xf32>
    %42 = vector.shape_cast %41 : vector<8xf32> to vector<8x1xf32>
    %43 = vector.broadcast %42 : vector<8x1xf32> to vector<8x8xf32>
    %44 = arith.subf %40, %43 : vector<8x8xf32>
    %45 = math.exp %44 : vector<8x8xf32>
    %cst_26 = arith.constant dense<0.000000e+00> : vector<8xf32>
    %46 = vector.multi_reduction <add>, %45, %cst_26 [1] : vector<8x8xf32> to vector<8xf32>
    %47 = vector.shape_cast %46 : vector<8xf32> to vector<8x1xf32>
    %48 = tpu.reciprocal %47 {approx = true} : vector<8x1xf32> -> vector<8x1xf32>
    %49 = vector.broadcast %48 : vector<8x1xf32> to vector<8x8xf32>
    %50 = arith.mulf %45, %49 : vector<8x8xf32>
    %51 = arith.truncf %50 : vector<8x8xf32> to vector<8x8xbf16>
    %cst_27 = arith.constant dense<0.000000e+00> : vector<8x8xf32>
    %52 = tpu.matmul %51, %37, %cst_27 {dimension_numbers = #tpu.dot_dimension_numbers<[1], [0], [0], [1], [0, 0, 1, 1], [], []>} : vector<8x8xbf16>, vector<8x8xbf16>, vector<8x8xf32> -> vector<8x8xf32>
    %53 = arith.truncf %52 : vector<8x8xf32> to vector<8x8xbf16>
    %c0_28 = arith.constant 0 : index
    %c8_29 = arith.constant 8 : index
    %54 = vector.load %arg11[%c0_28, %c8_29] : memref<8x32xbf16, #tpu.memory_space<vmem>>, vector<8x8xbf16>
    tpu.vector_store %arg11[%c0_28, %c8_29], %53 {strides = array<i32>} : memref<8x32xbf16, #tpu.memory_space<vmem>>, vector<8x8xbf16>,
    %c0_30 = arith.constant 0 : index
    %c16 = arith.constant 16 : index
    %55 = vector.load %arg10[%c0_30, %c16] : memref<8x32xbf16, #tpu.memory_space<vmem>>, vector<8x8xbf16>
    %c0_31 = arith.constant 0 : index
    %c16_32 = arith.constant 16 : index
    %56 = vector.load %arg9[%c0_31, %c16_32] : memref<8x64xbf16, #tpu.memory_space<vmem>>, vector<8x8xbf16>
    %c0_33 = arith.constant 0 : index
    %c48 = arith.constant 48 : index
    %57 = vector.load %arg9[%c0_33, %c48] : memref<8x64xbf16, #tpu.memory_space<vmem>>, vector<8x8xbf16>
    %cst_34 = arith.constant dense<0.000000e+00> : vector<8x8xf32>
    %58 = tpu.matmul %55, %56, %cst_34 {dimension_numbers = #tpu.dot_dimension_numbers<[1], [1], [0], [0], [0, 0, 1, 0], [], []>} : vector<8x8xbf16>, vector<8x8xbf16>, vector<8x8xf32> -> vector<8x8xf32>
    %cst_35 = arith.constant -1.000000e+30 : f32
    %59 = vector.broadcast %cst_35 : f32 to vector<8x8xf32>
    %60 = arith.select %14, %58, %59 : vector<8x8xi1>, vector<8x8xf32>
    %cst_36 = arith.constant dense<0xFF800000> : vector<8xf32>
    %61 = vector.multi_reduction <maximumf>, %60, %cst_36 [1] : vector<8x8xf32> to vector<8xf32>
    %62 = vector.shape_cast %61 : vector<8xf32> to vector<8x1xf32>
    %63 = vector.broadcast %62 : vector<8x1xf32> to vector<8x8xf32>
    %64 = arith.subf %60, %63 : vector<8x8xf32>
    %65 = math.exp %64 : vector<8x8xf32>
    %cst_37 = arith.constant dense<0.000000e+00> : vector<8xf32>
    %66 = vector.multi_reduction <add>, %65, %cst_37 [1] : vector<8x8xf32> to vector<8xf32>
    %67 = vector.shape_cast %66 : vector<8xf32> to vector<8x1xf32>
    %68 = tpu.reciprocal %67 {approx = true} : vector<8x1xf32> -> vector<8x1xf32>
    %69 = vector.broadcast %68 : vector<8x1xf32> to vector<8x8xf32>
    %70 = arith.mulf %65, %69 : vector<8x8xf32>
    %71 = arith.truncf %70 : vector<8x8xf32> to vector<8x8xbf16>
    %cst_38 = arith.constant dense<0.000000e+00> : vector<8x8xf32>
    %72 = tpu.matmul %71, %57, %cst_38 {dimension_numbers = #tpu.dot_dimension_numbers<[1], [0], [0], [1], [0, 0, 1, 1], [], []>} : vector<8x8xbf16>, vector<8x8xbf16>, vector<8x8xf32> -> vector<8x8xf32>
    %73 = arith.truncf %72 : vector<8x8xf32> to vector<8x8xbf16>
    %c0_39 = arith.constant 0 : index
    %c16_40 = arith.constant 16 : index
    %74 = vector.load %arg11[%c0_39, %c16_40] : memref<8x32xbf16, #tpu.memory_space<vmem>>, vector<8x8xbf16>
    tpu.vector_store %arg11[%c0_39, %c16_40], %73 {strides = array<i32>} : memref<8x32xbf16, #tpu.memory_space<vmem>>, vector<8x8xbf16>,
    %c0_41 = arith.constant 0 : index
    %c24 = arith.constant 24 : index
    %75 = vector.load %arg10[%c0_41, %c24] : memref<8x32xbf16, #tpu.memory_space<vmem>>, vector<8x8xbf16>
    %c0_42 = arith.constant 0 : index
    %c24_43 = arith.constant 24 : index
    %76 = vector.load %arg9[%c0_42, %c24_43] : memref<8x64xbf16, #tpu.memory_space<vmem>>, vector<8x8xbf16>
    %c0_44 = arith.constant 0 : index
    %c56 = arith.constant 56 : index
    %77 = vector.load %arg9[%c0_44, %c56] : memref<8x64xbf16, #tpu.memory_space<vmem>>, vector<8x8xbf16>
    %cst_45 = arith.constant dense<0.000000e+00> : vector<8x8xf32>
    %78 = tpu.matmul %75, %76, %cst_45 {dimension_numbers = #tpu.dot_dimension_numbers<[1], [1], [0], [0], [0, 0, 1, 0], [], []>} : vector<8x8xbf16>, vector<8x8xbf16>, vector<8x8xf32> -> vector<8x8xf32>
    %cst_46 = arith.constant -1.000000e+30 : f32
    %79 = vector.broadcast %cst_46 : f32 to vector<8x8xf32>
    %80 = arith.select %14, %78, %79 : vector<8x8xi1>, vector<8x8xf32>
    %cst_47 = arith.constant dense<0xFF800000> : vector<8xf32>
    %81 = vector.multi_reduction <maximumf>, %80, %cst_47 [1] : vector<8x8xf32> to vector<8xf32>
    %82 = vector.shape_cast %81 : vector<8xf32> to vector<8x1xf32>
    %83 = vector.broadcast %82 : vector<8x1xf32> to vector<8x8xf32>
    %84 = arith.subf %80, %83 : vector<8x8xf32>
    %85 = math.exp %84 : vector<8x8xf32>
    %cst_48 = arith.constant dense<0.000000e+00> : vector<8xf32>
    %86 = vector.multi_reduction <add>, %85, %cst_48 [1] : vector<8x8xf32> to vector<8xf32>
    %87 = vector.shape_cast %86 : vector<8xf32> to vector<8x1xf32>
    %88 = tpu.reciprocal %87 {approx = true} : vector<8x1xf32> -> vector<8x1xf32>
    %89 = vector.broadcast %88 : vector<8x1xf32> to vector<8x8xf32>
    %90 = arith.mulf %85, %89 : vector<8x8xf32>
    %91 = arith.truncf %90 : vector<8x8xf32> to vector<8x8xbf16>
    %cst_49 = arith.constant dense<0.000000e+00> : vector<8x8xf32>
    %92 = tpu.matmul %91, %77, %cst_49 {dimension_numbers = #tpu.dot_dimension_numbers<[1], [0], [0], [1], [0, 0, 1, 1], [], []>} : vector<8x8xbf16>, vector<8x8xbf16>, vector<8x8xf32> -> vector<8x8xf32>
    %93 = arith.truncf %92 : vector<8x8xf32> to vector<8x8xbf16>
    %c0_50 = arith.constant 0 : index
    %c24_51 = arith.constant 24 : index
    %94 = vector.load %arg11[%c0_50, %c24_51] : memref<8x32xbf16, #tpu.memory_space<vmem>>, vector<8x8xbf16>
    tpu.vector_store %arg11[%c0_50, %c24_51], %93 {strides = array<i32>} : memref<8x32xbf16, #tpu.memory_space<vmem>>, vector<8x8xbf16>,
    %c0_52 = arith.constant 0 : index
    %c0_53 = arith.constant 0 : index
    %95 = vector.load %arg11[%c0_52, %c0_53] : memref<8x32xbf16, #tpu.memory_space<vmem>>, vector<8x32xbf16>
    %c0_54 = arith.constant 0 : index
    %c0_55 = arith.constant 0 : index
    %96 = vector.load %arg6[%c0_54, %c0_55] : memref<32x32xbf16, #tpu.memory_space<vmem>>, vector<32x32xbf16>
    %cst_56 = arith.constant dense<0.000000e+00> : vector<8x32xf32>
    %97 = tpu.matmul %95, %96, %cst_56 {dimension_numbers = #tpu.dot_dimension_numbers<[1], [0], [0], [1], [0, 0, 1, 1], [], []>} : vector<8x32xbf16>, vector<32x32xbf16>, vector<8x32xf32> -> vector<8x32xf32>
    %c0_57 = arith.constant 0 : index
    %c0_58 = arith.constant 0 : index
    %98 = vector.load %arg7[%c0_57, %c0_58] : memref<1x32xf32, #tpu.memory_space<vmem>>, vector<1x32xf32>
    %99 = vector.broadcast %98 : vector<1x32xf32> to vector<8x32xf32>
    %100 = arith.addf %97, %99 : vector<8x32xf32>
    %c0_59 = arith.constant 0 : index
    %c0_60 = arith.constant 0 : index
    %c0_61 = arith.constant 0 : index
    %101 = vector.load %arg8[%c0_59, %c0_60, %c0_61] : memref<1x8x32xf32, #tpu.memory_space<vmem>>, vector<1x8x32xf32>
    %102 = vector.shape_cast %101 : vector<1x8x32xf32> to vector<8x32xf32>
    %103 = vector.shape_cast %100 : vector<8x32xf32> to vector<1x8x32xf32>
    tpu.vector_store %arg8[%c0_59, %c0_60, %c0_61], %103 {strides = array<i32>} : memref<1x8x32xf32, #tpu.memory_space<vmem>>, vector<1x8x32xf32>,
    return
  }
  func.func @transform_0(%arg0: i32, %arg1: i32) -> (i32, i32, i32) {
    %c0_i32 = arith.constant 0 : i32
    %c0_i32_0 = arith.constant 0 : i32
    return %arg0, %arg1, %c0_i32 : i32, i32, i32
  }
  func.func @transform_1(%arg0: i32, %arg1: i32) -> (i32, i32, i32) {
    %c0_i32 = arith.constant 0 : i32
    %c0_i32_0 = arith.constant 0 : i32
    %c0_i32_1 = arith.constant 0 : i32
    return %arg0, %c0_i32, %c0_i32_0 : i32, i32, i32
  }
  func.func @transform_2(%arg0: i32, %arg1: i32) -> (i32, i32) {
    %c0_i32 = arith.constant 0 : i32
    %c0_i32_0 = arith.constant 0 : i32
    %c0_i32_1 = arith.constant 0 : i32
    return %c0_i32, %c0_i32_0 : i32, i32
  }
  func.func @transform_3(%arg0: i32, %arg1: i32) -> (i32, i32) {
    %c0_i32 = arith.constant 0 : i32
    %c0_i32_0 = arith.constant 0 : i32
    %c0_i32_1 = arith.constant 0 : i32
    return %c0_i32, %c0_i32_0 : i32, i32
  }
  func.func @transform_4(%arg0: i32, %arg1: i32) -> (i32, i32) {
    %c0_i32 = arith.constant 0 : i32
    %c0_i32_0 = arith.constant 0 : i32
    %c0_i32_1 = arith.constant 0 : i32
    return %c0_i32, %c0_i32_0 : i32, i32
  }
  func.func @transform_5(%arg0: i32, %arg1: i32) -> (i32, i32) {
    %c0_i32 = arith.constant 0 : i32
    %c0_i32_0 = arith.constant 0 : i32
    %c0_i32_1 = arith.constant 0 : i32
    return %c0_i32, %c0_i32_0 : i32, i32
  }
  func.func @transform_6(%arg0: i32, %arg1: i32) -> (i32, i32, i32) {
    %c0_i32 = arith.constant 0 : i32
    %c0_i32_0 = arith.constant 0 : i32
    return %arg0, %arg1, %c0_i32 : i32, i32, i32
  }
}

</mosaic_0001>

<llo_original>
// kernel: tpu_custom_call.1
$region0: #{tpu_custom_call.1}
  #allocation0 [shape = 'u32[]', space=smem, size = 0x4, offset = 0x4, fixed_abs, tag = 'smem constant byte address 0x4 - core index']
  #allocation1 [shape = 'u32[72,128]{1,0:T(1,128)}', space=vmem, size = 0x9000, scoped, tag = 'internal scratch']
  #allocation2 [shape = 'bf16[8,64]{1,0:T(8,128)(2,1)}', space=vmem, size = 0x800, scoped, tag = 'scratch operand']
  #allocation3 [shape = 'bf16[8,32]{1,0:T(8,128)(2,1)}', space=vmem, size = 0x800, scoped, tag = 'scratch operand']
  #allocation4 [shape = 'bf16[8,32]{1,0:T(8,128)(2,1)}', space=vmem, size = 0x800, scoped, tag = 'scratch operand']
  %s0 = inlined_call_operand.hbm [shape: bf16[2,8,32], index: 0, kind: input, shape index: {}]
  %s1 = inlined_call_operand.hbm [shape: bf16[2,8,32], index: 1, kind: input, shape index: {}]
  %s2 = inlined_call_operand.hbm [shape: bf16[32,32], index: 2, kind: input, shape index: {}]
  %s3 = inlined_call_operand.hbm [shape: bf16[32,64], index: 3, kind: input, shape index: {}]
  %s4 = inlined_call_operand.hbm [shape: bf16[32,32], index: 4, kind: input, shape index: {}]
  %s5 = inlined_call_operand.vmem [shape: f32[1,32], index: 5, kind: input, shape index: {}]
  %s6 = inlined_call_operand.hbm [shape: f32[2,8,32], index: 6, kind: output, shape index: {}]
  %s7 = sld [smem:[#allocation0]]
  $region81: #{tpu_custom_call.1} parent=0
    _
  %s9 = ssub.s32 1, %s7
  %s10 = scalar_select 0, %s9, %s7
  $region1: #{tpu_custom_call.1} parent=0
    #allocation5 [shape = 'u8[4096]{0}', space=vmem, size = 0x1000, scoped, tag = 'input window, operand 0']
    #allocation6 [shape = 's32[2]{0}', space=sflag, size = 0x8, scoped, tag = 'scoped memory for tpu_custom_call.1']
    #allocation7 [shape = 's32[2]{0}', space=sflag, size = 0x8, scoped, tag = 'scoped memory for tpu_custom_call.1']
    #allocation8 [shape = 'u8[4096]{0}', space=vmem, size = 0x1000, scoped, tag = 'input window, operand 1']
    #allocation9 [shape = 's32[2]{0}', space=sflag, size = 0x8, scoped, tag = 'scoped memory for tpu_custom_call.1']
    #allocation10 [shape = 'u8[8192]{0}', space=vmem, size = 0x2000, scoped, tag = 'input window, operand 2, single buffered']
    #allocation11 [shape = 'u8[8192]{0}', space=vmem, size = 0x2000, scoped, tag = 'input window, operand 3, single buffered']
    #allocation12 [shape = 's32[1]{0}', space=sflag, size = 0x4, scoped, tag = 'scoped memory for tpu_custom_call.1']
    #allocation13 [shape = 'u8[8192]{0}', space=vmem, size = 0x2000, scoped, tag = 'input window, operand 4, single buffered']
    #allocation14 [shape = 'u8[8192]{0}', space=vmem, size = 0x2000, scoped, tag = 'output window, operand 0']
    %11 = vsyncpa [#allocation6], 0
    %s12 = scalar_lea.sflag [#allocation6], 1
    %13 = vsyncpa %s12, 0
    %14 = vsyncpa [#allocation9], 0
    %s15 = scalar_lea.sflag [#allocation9], 1
    %16 = vsyncpa %s15, 0
    %17 = vsyncpa [#allocation12], 0
    %18 = vsyncpa [#allocation7], 0
    %s19 = scalar_lea.sflag [#allocation7], 1
    %20 = vsyncpa %s19, 0
    loop: start=0, step=1, limit=4
    $region2: #{tpu_custom_call.1} parent=1 // loop_pre_header
      _
    $region3: #{tpu_custom_call.1} parent=1 // loop_header
      %s22 = sphi 0, %s26
      %p23 = scmp.ge.s32.totalorder %s22, 4
      %s29 = sphi 0, %s41
      %s30 = sphi 0, %s37
      %s31 = sphi 0, %s29
      %s32 = sphi 0, %s30
      %s33 = sphi 0, %s31
      %s34 = sphi 0, %s32
      %s46 = sphi 0, %s48
      %s49 = sphi 0, %s46
      %s50 = sphi 0, %s49
      %s66 = sphi 0, %s50
      %s72 = sphi 0, %s74
      %s75 = sphi 0, %s72
      %s76 = sphi 0, %s75
      %s92 = sphi 0, %s76
      %s96 = sphi 0, %s96
      %s98 = sphi 0, %s96
      %s99 = sphi 0, %s98
      %s113 = sphi 0, %s99
      %s117 = sphi 0, %s117
      %s119 = sphi 0, %s117
      %s120 = sphi 0, %s119
      %s134 = sphi 0, %s120
      %s138 = sphi 0, %s138
      %s140 = sphi 0, %s138
      %s141 = sphi 0, %s140
      %s155 = sphi 0, %s141
      %s159 = sphi 0, %s159
      %s161 = sphi 0, %s159
      %s162 = sphi 0, %s161
      %s176 = sphi 0, %s162
      %s184 = sphi 0, %s186
      %s187 = sphi 0, %s184
      %s188 = sphi 0, %s187
      %s204 = sphi 0, %s188
    $region4: #{tpu_custom_call.1} parent=1 // loop_header_branch
      %25 = sbr.rel (%p23) target = $region8
    $region5: #{tpu_custom_call.1} parent=1 // loop_body
      %s27 = ssub.s32 %s22, 1
      %s28 = ssub.s32 %s22, 2
      %s35 = sadd.s32 1, %s30
      %p36 = scmp.ge.s32.totalorder %s35, 1
      %s37 = scalar_select %p36, 0, %s35
      %s38 = sadd.s32 1, %s29
      %s39 = scalar_select %p36, %s38, %s29
      %p40 = scmp.ge.s32.totalorder %s39, 2
      %s41 = scalar_select %p40, 0, %s39
      %s42 = ssub.s32 %s29, %s41
      %s43 = ssub.s32 %s30, %s37
      %s44 = sor.u32 %s42, %s43
      %p45 = scmp.eq.s32.totalorder %s44, 0
      %s47 = sadd.s32 %s46, 1
      %s48 = scalar_select %p45, %s46, %s47
      %p51 = pneg %p45
      %p52 = scmp.eq.s32.totalorder %s22, 1
      %p53 = por %p51, %p52
      %p54 = scmp.ne.s32.totalorder %s46, %s49
      %p55 = scmp.eq.s32.totalorder %s22, 0
      %p56 = por %p54, %p55
      %p57 = scmp.ne.s32.totalorder %s46, %s49
      %p58 = scmp.eq.s32.totalorder %s27, 1
      %p59 = por %p57, %p58
      %p60 = scmp.ne.s32.totalorder %s49, %s50
      %p61 = scmp.eq.s32.totalorder %s27, 0
      %p62 = por %p60, %p61
      %p63 = scmp.ne.s32.totalorder %s49, %s50
      %p64 = scmp.eq.s32.totalorder %s28, 1
      %p65 = por %p63, %p64
      %p67 = scmp.ne.s32.totalorder %s50, %s66
      %p68 = scmp.eq.s32.totalorder %s28, 0
      %p69 = por %p67, %p68
      %s70 = ssub.s32 %s29, %s41
      %p71 = scmp.eq.s32.totalorder %s70, 0
      %s73 = sadd.s32 %s72, 1
      %s74 = scalar_select %p71, %s72, %s73
      %p77 = pneg %p71
      %p78 = scmp.eq.s32.totalorder %s22, 1
      %p79 = por %p77, %p78
      %p80 = scmp.ne.s32.totalorder %s72, %s75
      %p81 = scmp.eq.s32.totalorder %s22, 0
      %p82 = por %p80, %p81
      %p83 = scmp.ne.s32.totalorder %s72, %s75
      %p84 = scmp.eq.s32.totalorder %s27, 1
      %p85 = por %p83, %p84
      %p86 = scmp.ne.s32.totalorder %s75, %s76
      %p87 = scmp.eq.s32.totalorder %s27, 0
      %p88 = por %p86, %p87
      %p89 = scmp.ne.s32.totalorder %s75, %s76
      %p90 = scmp.eq.s32.totalorder %s28, 1
      %p91 = por %p89, %p90
      %p93 = scmp.ne.s32.totalorder %s76, %s92
      %p94 = scmp.eq.s32.totalorder %s28, 0
      %p95 = por %p93, %p94
      %s97 = sadd.s32 %s96, 1
      %p100 = scmp.eq.s32.totalorder %s22, 1
      %p101 = scmp.ne.s32.totalorder %s96, %s98
      %p102 = scmp.eq.s32.totalorder %s22, 0
      %p103 = por %p101, %p102
      %p104 = scmp.ne.s32.totalorder %s96, %s98
      %p105 = scmp.eq.s32.totalorder %s27, 1
      %p106 = por %p104, %p105
      %p107 = scmp.ne.s32.totalorder %s98, %s99
      %p108 = scmp.eq.s32.totalorder %s27, 0
      %p109 = por %p107, %p108
      %p110 = scmp.ne.s32.totalorder %s98, %s99
      %p111 = scmp.eq.s32.totalorder %s28, 1
      %p112 = por %p110, %p111
      %p114 = scmp.ne.s32.totalorder %s99, %s113
      %p115 = scmp.eq.s32.totalorder %s28, 0
      %p116 = por %p114, %p115
      %s118 = sadd.s32 %s117, 1
      %p121 = scmp.eq.s32.totalorder %s22, 1
      %p122 = scmp.ne.s32.totalorder %s117, %s119
      %p123 = scmp.eq.s32.totalorder %s22, 0
      %p124 = por %p122, %p123
      %p125 = scmp.ne.s32.totalorder %s117, %s119
      %p126 = scmp.eq.s32.totalorder %s27, 1
      %p127 = por %p125, %p126
      %p128 = scmp.ne.s32.totalorder %s119, %s120
      %p129 = scmp.eq.s32.totalorder %s27, 0
      %p130 = por %p128, %p129
      %p131 = scmp.ne.s32.totalorder %s119, %s120
      %p132 = scmp.eq.s32.totalorder %s28, 1
      %p133 = por %p131, %p132
      %p135 = scmp.ne.s32.totalorder %s120, %s134
      %p136 = scmp.eq.s32.totalorder %s28, 0
      %p137 = por %p135, %p136
      %s139 = sadd.s32 %s138, 1
      %p142 = scmp.eq.s32.totalorder %s22, 1
      %p143 = scmp.ne.s32.totalorder %s138, %s140
      %p144 = scmp.eq.s32.totalorder %s22, 0
      %p145 = por %p143, %p144
      %p146 = scmp.ne.s32.totalorder %s138, %s140
      %p147 = scmp.eq.s32.totalorder %s27, 1
      %p148 = por %p146, %p147
      %p149 = scmp.ne.s32.totalorder %s140, %s141
      %p150 = scmp.eq.s32.totalorder %s27, 0
      %p151 = por %p149, %p150
      %p152 = scmp.ne.s32.totalorder %s140, %s141
      %p153 = scmp.eq.s32.totalorder %s28, 1
      %p154 = por %p152, %p153
      %p156 = scmp.ne.s32.totalorder %s141, %s155
      %p157 = scmp.eq.s32.totalorder %s28, 0
      %p158 = por %p156, %p157
      %s160 = sadd.s32 %s159, 1
      %p163 = scmp.eq.s32.totalorder %s22, 1
      %p164 = scmp.ne.s32.totalorder %s159, %s161
      %p165 = scmp.eq.s32.totalorder %s22, 0
      %p166 = por %p164, %p165
      %p167 = scmp.ne.s32.totalorder %s159, %s161
      %p168 = scmp.eq.s32.totalorder %s27, 1
      %p169 = por %p167, %p168
      %p170 = scmp.ne.s32.totalorder %s161, %s162
      %p171 = scmp.eq.s32.totalorder %s27, 0
      %p172 = por %p170, %p171
      %p173 = scmp.ne.s32.totalorder %s161, %s162
      %p174 = scmp.eq.s32.totalorder %s28, 1
      %p175 = por %p173, %p174
      %p177 = scmp.ne.s32.totalorder %s162, %s176
      %p178 = scmp.eq.s32.totalorder %s28, 0
      %p179 = por %p177, %p178
      %s180 = ssub.s32 %s29, %s41
      %s181 = ssub.s32 %s30, %s37
      %s182 = sor.u32 %s180, %s181
      %p183 = scmp.eq.s32.totalorder %s182, 0
      %s185 = sadd.s32 %s184, 1
      %s186 = scalar_select %p183, %s184, %s185
      %p189 = pneg %p183
      %p190 = scmp.eq.s32.totalorder %s22, 1
      %p191 = por %p189, %p190
      %p192 = scmp.ne.s32.totalorder %s184, %s187
      %p193 = scmp.eq.s32.totalorder %s22, 0
      %p194 = por %p192, %p193
      %p195 = scmp.ne.s32.totalorder %s184, %s187
      %p196 = scmp.eq.s32.totalorder %s27, 1
      %p197 = por %p195, %p196
      %p198 = scmp.ne.s32.totalorder %s187, %s188
      %p199 = scmp.eq.s32.totalorder %s27, 0
      %p200 = por %p198, %p199
      %p201 = scmp.ne.s32.totalorder %s187, %s188
      %p202 = scmp.eq.s32.totalorder %s28, 1
      %p203 = por %p201, %p202
      %p205 = scmp.ne.s32.totalorder %s188, %s204
      %p206 = scmp.eq.s32.totalorder %s28, 0
      %p207 = por %p205, %p206
      %p208 = scmp.le.s32.totalorder 1, %s22
      %p209 = scmp.lt.s32.totalorder %s22, 3
      %p210 = pnand %p208, %p209
      %p211 = pneg %p210
      // Predicated region
      $region9: #{tpu_custom_call.1} parent=5 // pred_check
        _
      $region10: #{tpu_custom_call.1} parent=5 // pred_check_branch
        %213 = sbr.rel (%p210) target = $region12
      $region11: #{tpu_custom_call.1} parent=5 // pred_region
        %s214 = ssub.s32 %s22, 1
        // Predicated region
        $region13: #{tpu_custom_call.1} parent=11 // pred_check
          %p215 = pneg %p109
        $region14: #{tpu_custom_call.1} parent=11 // pred_check_branch
          %217 = sbr.rel (%p215) target = $region16
        $region15: #{tpu_custom_call.1} parent=11 // pred_region
          %219 = vsyncadd [#allocation9], 0
          %s220 = sshll.u32 %s2, 4
          %s221 = int_to_ptr.hbm [resolvable:$true] %s220
          %s222 = sshll.u32 [#allocation10], 4
          %s223 = int_to_ptr.vmem [resolvable:$true] %s222
          %228 = dma.hbm_to_vmem [thread:$0]  %s221, 256, %s223, [#allocation9], 64, 64, 4
        $region16: #{tpu_custom_call.1} parent=11 // pred_fallthru
          _
        // Predicated region
        $region17: #{tpu_custom_call.1} parent=11 // pred_check
          %p229 = pneg %p130
        $region18: #{tpu_custom_call.1} parent=11 // pred_check_branch
          %231 = sbr.rel (%p229) target = $region20
        $region19: #{tpu_custom_call.1} parent=11 // pred_region
          %233 = vsyncadd [#allocation12], 0
          %s234 = sshll.u32 %s3, 4
          %s235 = int_to_ptr.hbm [resolvable:$true] %s234
          %s236 = sshll.u32 [#allocation11], 4
          %s237 = int_to_ptr.vmem [resolvable:$true] %s236
          %242 = dma.hbm_to_vmem [thread:$0]  %s235, 256, %s237, [#allocation12], 64, 64, 4
        $region20: #{tpu_custom_call.1} parent=11 // pred_fallthru
          _
        // Predicated region
        $region21: #{tpu_custom_call.1} parent=11 // pred_check
          %p243 = pneg %p151
        $region22: #{tpu_custom_call.1} parent=11 // pred_check_branch
          %245 = sbr.rel (%p243) target = $region24
        $region23: #{tpu_custom_call.1} parent=11 // pred_region
          %247 = vsyncadd [#allocation12], 0
          %s248 = sshll.u32 %s4, 4
          %s249 = int_to_ptr.hbm [resolvable:$true] %s248
          %s250 = sshll.u32 [#allocation13], 4
          %s251 = int_to_ptr.vmem [resolvable:$true] %s250
          %256 = dma.hbm_to_vmem [thread:$0]  %s249, 256, %s251, [#allocation12], 64, 64, 4
        $region24: #{tpu_custom_call.1} parent=11 // pred_fallthru
          _
        // Predicated region
        $region25: #{tpu_custom_call.1} parent=11 // pred_check
          %p257 = pneg %p172
        $region26: #{tpu_custom_call.1} parent=11 // pred_check_branch
          %259 = sbr.rel (%p257) target = $region28
        $region27: #{tpu_custom_call.1} parent=11 // pred_region
          _
        $region28: #{tpu_custom_call.1} parent=11 // pred_fallthru
          _
      $region12: #{tpu_custom_call.1} parent=5 // pred_fallthru
        _
      %p260 = scmp.lt.s32.totalorder %s22, 2
      // Predicated region
      $region29: #{tpu_custom_call.1} parent=5 // pred_check
        %p261 = pneg %p260
      $region30: #{tpu_custom_call.1} parent=5 // pred_check_branch
        %263 = sbr.rel (%p261) target = $region32
      $region31: #{tpu_custom_call.1} parent=5 // pred_region
        // Predicated region
        $region33: #{tpu_custom_call.1} parent=31 // pred_check
          %p264 = pneg %p56
        $region34: #{tpu_custom_call.1} parent=31 // pred_check_branch
          %266 = sbr.rel (%p264) target = $region36
        $region35: #{tpu_custom_call.1} parent=31 // pred_region
          %s267 = sand.u32 %s46, 1
          %s268 = scalar_lea.sflag [#allocation6], %s267
          %s269 = sand.u32 %s46, 1
          %s270 = smul.addr %s269, 4
          %s271 = scalar_lea.vmem [#allocation5], %s270
          %273 = vsyncadd %s268, 0
          %s274 = sadd.s32 %s30, %s29
          %s275 = smul.addr %s274, 4
          %s276 = scalar_lea.hbm %s0, %s275
          %s278 = sshll.u32 %s276, 4
          %s279 = int_to_ptr.hbm [resolvable:$true] %s278
          %s280 = sshll.u32 %s271, 4
          %s281 = int_to_ptr.vmem [resolvable:$true] %s280
          %283 = dma.hbm_to_vmem [thread:$0]  %s279, 64, %s281, %s268
        $region36: #{tpu_custom_call.1} parent=31 // pred_fallthru
          _
        // Predicated region
        $region37: #{tpu_custom_call.1} parent=31 // pred_check
          %p284 = pneg %p82
        $region38: #{tpu_custom_call.1} parent=31 // pred_check_branch
          %286 = sbr.rel (%p284) target = $region40
        $region39: #{tpu_custom_call.1} parent=31 // pred_region
          %s287 = sand.u32 %s22, 1
          %s288 = scalar_lea.sflag [#allocation9], %s287
          %s289 = sand.u32 %s72, 1
          %s290 = smul.addr %s289, 4
          %s291 = scalar_lea.vmem [#allocation8], %s290
          %293 = vsyncadd %s288, 0
          %s294 = smul.addr %s29, 4
          %s295 = scalar_lea.hbm %s1, %s294
          %s297 = sshll.u32 %s295, 4
          %s298 = int_to_ptr.hbm [resolvable:$true] %s297
          %s299 = sshll.u32 %s291, 4
          %s300 = int_to_ptr.vmem [resolvable:$true] %s299
          %302 = dma.hbm_to_vmem [thread:$0]  %s298, 64, %s300, %s288
        $region40: #{tpu_custom_call.1} parent=31 // pred_fallthru
          _
      $region32: #{tpu_custom_call.1} parent=5 // pred_fallthru
        _
      %p303 = scmp.le.s32.totalorder 1, %s22
      %p304 = scmp.lt.s32.totalorder %s22, 3
      %p305 = pnand %p303, %p304
      %p306 = pneg %p305
      // Predicated region
      $region41: #{tpu_custom_call.1} parent=5 // pred_check
        _
      $region42: #{tpu_custom_call.1} parent=5 // pred_check_branch
        %308 = sbr.rel (%p305) target = $region44
      $region43: #{tpu_custom_call.1} parent=5 // pred_region
        %s309 = ssub.s32 %s22, 1
        %s310 = sand.u32 %s49, 1
        %s311 = scalar_lea.sflag [#allocation6], %s310
        %s312 = sand.u32 %s49, 1
        %s313 = smul.addr %s312, 4
        %s314 = scalar_lea.vmem [#allocation5], %s313
        // Predicated region
        $region45: #{tpu_custom_call.1} parent=43 // pred_check
          %p315 = pneg %p62
        $region46: #{tpu_custom_call.1} parent=43 // pred_check_branch
          %317 = sbr.rel (%p315) target = $region48
        $region47: #{tpu_custom_call.1} parent=43 // pred_region
          %319 = dma.done %s311, 64
        $region48: #{tpu_custom_call.1} parent=43 // pred_fallthru
          _
        %s320 = sand.u32 %s27, 1
        %s321 = scalar_lea.sflag [#allocation9], %s320
        %s322 = sand.u32 %s75, 1
        %s323 = smul.addr %s322, 4
        %s324 = scalar_lea.vmem [#allocation8], %s323
        // Predicated region
        $region49: #{tpu_custom_call.1} parent=43 // pred_check
          %p325 = pneg %p88
        $region50: #{tpu_custom_call.1} parent=43 // pred_check_branch
          %327 = sbr.rel (%p325) target = $region52
        $region51: #{tpu_custom_call.1} parent=43 // pred_region
          %329 = dma.done %s321, 64
        $region52: #{tpu_custom_call.1} parent=43 // pred_fallthru
          _
        // Predicated region
        $region53: #{tpu_custom_call.1} parent=43 // pred_check
          %p330 = pneg %p109
        $region54: #{tpu_custom_call.1} parent=43 // pred_check_branch
          %332 = sbr.rel (%p330) target = $region56
        $region55: #{tpu_custom_call.1} parent=43 // pred_region
          %334 = dma.done [#allocation9], 256
        $region56: #{tpu_custom_call.1} parent=43 // pred_fallthru
          _
        // Predicated region
        $region57: #{tpu_custom_call.1} parent=43 // pred_check
          %p335 = pneg %p130
        $region58: #{tpu_custom_call.1} parent=43 // pred_check_branch
          %337 = sbr.rel (%p335) target = $region60
        $region59: #{tpu_custom_call.1} parent=43 // pred_region
          %339 = dma.done [#allocation12], 256
        $region60: #{tpu_custom_call.1} parent=43 // pred_fallthru
          _
        // Predicated region
        $region61: #{tpu_custom_call.1} parent=43 // pred_check
          %p340 = pneg %p151
        $region62: #{tpu_custom_call.1} parent=43 // pred_check_branch
          %342 = sbr.rel (%p340) target = $region64
        $region63: #{tpu_custom_call.1} parent=43 // pred_region
          %344 = dma.done [#allocation12], 256
        $region64: #{tpu_custom_call.1} parent=43 // pred_fallthru
          _
        %s345 = sand.u32 %s49, 1
        %s346 = scalar_lea.sflag [#allocation6], %s345
        %s347 = sand.u32 %s49, 1
        %s348 = smul.addr %s347, 4
        %s349 = scalar_lea.vmem [#allocation5], %s348
        %p350 = pneg %p62
        %p351 = pneg %p59
        %s352 = sand.u32 %s27, 1
        %s353 = scalar_lea.sflag [#allocation9], %s352
        %s354 = sand.u32 %s75, 1
        %s355 = smul.addr %s354, 4
        %s356 = scalar_lea.vmem [#allocation8], %s355
        %p357 = pneg %p88
        %p358 = pneg %p85
        %p359 = pneg %p109
        %p360 = pneg %p106
        %p361 = pneg %p130
        %p362 = pneg %p127
        %p363 = pneg %p151
        %p364 = pneg %p148
        %p365 = pneg %p172
        %p366 = pneg %p169
        %p367 = pneg %p200
        %p368 = pneg %p197
        %s369 = sand.u32 %s187, 1
        %s370 = scalar_lea.sflag [#allocation7], %s369
        %s371 = sand.u32 %s187, 1
        %s372 = smul.addr %s371, 8
        %s373 = scalar_lea.vmem [#allocation14], %s372
        %p375 = scmp.eq.s32.totalorder %s32, 0
        // Predicated region
        $region65: #{tpu_custom_call.1} parent=43 // pred_check
          %p376 = pneg %p375
        $region66: #{tpu_custom_call.1} parent=43 // pred_check_branch
          %378 = sbr.rel (%p376) target = $region68
        $region67: #{tpu_custom_call.1} parent=43 // pred_region
          %v379 = vld [vmem:[%s324] sm:$0xf]
          %v380 = vld [vmem:[#allocation11] sm:$0xf]
          %v381 = vld [vmem:[#allocation11 + $0x4] sm:$0xf]
          %v382 = vld [vmem:[#allocation11 + $0x8] sm:$0xf]
          %v383 = vld [vmem:[#allocation11 + $0xc] sm:$0xf]
          %v388 = vunpack.c.l.b16 %v380
          %v389 = vunpack.c.l.b16 %v381
          %v390 = vunpack.c.l.b16 %v382
          %v391 = vunpack.c.l.b16 %v383
          %v392 = vpack.c.b16 %v389, %v388
          %v393 = vpack.c.b16 %v391, %v390
          %vm396 = vcmask 261120
          %v398 = vsel %vm396, %v379, 0
          %400 = vmatpush.bf16.msra.mxu0 0
          %401 = vmatpush.bf16.msra.mxu0 0
          %402 = vmatpush.bf16.msra.mxu0 0
          %403 = vmatpush.bf16.msra.mxu0 0
          %404 = vmatpush.bf16.msra.mxu0 0
          %405 = vmatpush.bf16.msra.mxu0 0
          %406 = vmatpush.bf16.msra.mxu0 %v393
          %407 = vmatpush.bf16.msra.mxu0 %v392
          %408 = vmatmul.bf16.gmra.mxu0 %v398
          %v409 = vpop.f32.mrf.mxu0
          %v410 = vadd.f32 0.0, %v409
          %v411 = vpop.f32.mrf.mxu0
          %412 = vdwg.mxu0
          %v413 = vpack.c.bf16 %v410, %v410
          %vm414 = vcmask 519168
          %415 = vst.msk [vmem:[#allocation2] sm:$0xf] %vm414, %v413
        $region68: #{tpu_custom_call.1} parent=43 // pred_fallthru
          _
        %v416 = vld [vmem:[%s314] sm:$0xf]
        %v417 = vld [vmem:[#allocation10] sm:$0xf]
        %v418 = vld [vmem:[#allocation10 + $0x4] sm:$0xf]
        %v419 = vld [vmem:[#allocation10 + $0x8] sm:$0xf]
        %v420 = vld [vmem:[#allocation10 + $0xc] sm:$0xf]
        %v425 = vunpack.c.l.b16 %v417
        %v426 = vunpack.c.l.b16 %v418
        %v427 = vunpack.c.l.b16 %v419
        %v428 = vunpack.c.l.b16 %v420
        %v429 = vpack.c.b16 %v426, %v425
        %v430 = vpack.c.b16 %v428, %v427
        %vm433 = vcmask 261120
        %v435 = vsel %vm433, %v416, 0
        %437 = vmatpush.bf16.msra.mxu0 0
        %438 = vmatpush.bf16.msra.mxu0 0
        %439 = vmatpush.bf16.msra.mxu0 0
        %440 = vmatpush.bf16.msra.mxu0 0
        %441 = vmatpush.bf16.msra.mxu0 0
        %442 = vmatpush.bf16.msra.mxu0 0
        %443 = vmatpush.bf16.msra.mxu0 %v430
        %444 = vmatpush.bf16.msra.mxu0 %v429
        %445 = vmatmul.bf16.gmra.mxu0 %v435
        %v446 = vpop.f32.mrf.mxu0
        %v447 = vadd.f32 0.0, %v446
        %v448 = vpop.f32.mrf.mxu0
        %449 = vdwg.mxu0
        %v450 = vpack.c.bf16 %v447, %v447
        %vm451 = vcmask 257024
        %452 = vst.msk [vmem:[#allocation3] sm:$0xf] %vm451, %v450
        %s453 = smul.u32 %s32, 8
        %v454 = vlaneseq
        %v455 = vshrl.u32 %v454, 7
        %v456 = vstv %s453
        %v457 = vadd.s32 %v456, %v455
        %v458 = vlaneseq
        %v459 = vand.u32 %v458, 127
        %vm460 = vcmp.ge.s32.totalorder %v457, %v459
        %v461 = vld [vmem:[#allocation3] sm:$0xf]
        %v462 = vld [vmem:[#allocation2] sm:$0xf]
        %vm463 = vcmask 64512
        %v465 = vsel %vm463, %v461, 0
        %v468 = vsel %vm463, %v462, 0
        %470 = vmatpush.bf16.xpose.msra.mxu0 0
        %471 = vmatpush.bf16.xpose.msra.mxu0 0
        %472 = vmatpush.bf16.xpose.msra.mxu0 0
        %473 = vmatpush.bf16.xpose.msra.mxu0 0
        %474 = vmatpush.bf16.xpose.msra.mxu0 0
        %475 = vmatpush.bf16.xpose.msra.mxu0 0
        %476 = vmatpush.bf16.xpose.msra.mxu0 0
        %477 = vmatpush.bf16.xpose.msra.mxu0 %v468
        %478 = vmatmul.bf16.gmra.mxu0 %v465
        %v479 = vpop.f32.mrf.mxu0
        %v480 = vadd.f32 0.0, %v479
        %v481 = vpop.f32.mrf.mxu0
        %482 = vdwg.mxu0
        %v483 = vsel %vm460, %v480, -1e+30
        %v484 = vsel %vm463, %v483, -inf
        %485 = vmax.xlane.f32.xlu0 %v484
        %v486 = vpop.xlane.xlu0 %485
        %v487 = vsub.f32 %v483, %v486
        %v488 = vmul.f32 %v487, 1.442695
        %v489 = vpow.pop %v488
        %v490 = vsel %vm463, %v489, 0.0
        %491 = vadd.xlane.f32.xlu0 %v490
        %v492 = vpop.xlane.xlu0 %491
        %v493 = vrcp.pop %v492
        %v494 = vmul.f32 %v489, %v493
        %v495 = vpack.c.bf16 %v494, %v494
        %v497 = vunpack.c.l.b16 %v462
        %v498 = vpack.c.b16 %v497, %v497
        %499 = vrot.lane.b32.xlu0 %v498, 96
        %v500 = vpop.permute.xlu0 %499
        %v502 = vsel %vm463, %v495, 0
        %vm504 = vcmask 1043456
        %v506 = vsel %vm504, %v500, 0
        %508 = vmatpush.bf16.msra.mxu0 0
        %509 = vmatpush.bf16.msra.mxu0 0
        %510 = vmatpush.bf16.msra.mxu0 0
        %511 = vmatpush.bf16.msra.mxu0 0
        %512 = vmatpush.bf16.msra.mxu0 0
        %513 = vmatpush.bf16.msra.mxu0 0
        %514 = vmatpush.bf16.msra.mxu0 0
        %515 = vmatpush.bf16.msra.mxu0 %v506
        %516 = vmatmul.bf16.gmra.mxu0 %v502
        %v517 = vpop.f32.mrf.mxu0
        %v518 = vadd.f32 0.0, %v517
        %v519 = vpop.f32.mrf.mxu0
        %520 = vdwg.mxu0
        %v521 = vpack.c.bf16 %v518, %v518
        %vm522 = vcmask 60416
        %523 = vst.msk [vmem:[#allocation4] sm:$0xf] %vm522, %v521
        %v524 = vld [vmem:[#allocation3] sm:$0xf]
        %v525 = vld [vmem:[#allocation2] sm:$0xf]
        %v527 = vunpack.c.l.b16 %v524
        %v528 = vpack.c.b16 %v527, %v527
        %529 = vrot.lane.b32.xlu0 %v528, 120
        %v530 = vpop.permute.xlu0 %529
        %v532 = vunpack.c.l.b16 %v525
        %v533 = vpack.c.b16 %v532, %v532
        %534 = vrot.lane.b32.xlu0 %v533, 120
        %v535 = vpop.permute.xlu0 %534
        %v537 = vsel %vm463, %v530, 0
        %v540 = vsel %vm463, %v535, 0
        %542 = vmatpush.bf16.xpose.msra.mxu0 0
        %543 = vmatpush.bf16.xpose.msra.mxu0 0
        %544 = vmatpush.bf16.xpose.msra.mxu0 0
        %545 = vmatpush.bf16.xpose.msra.mxu0 0
        %546 = vmatpush.bf16.xpose.msra.mxu0 0
        %547 = vmatpush.bf16.xpose.msra.mxu0 0
        %548 = vmatpush.bf16.xpose.msra.mxu0 0
        %549 = vmatpush.bf16.xpose.msra.mxu0 %v540
        %550 = vmatmul.bf16.gmra.mxu0 %v537
        %v551 = vpop.f32.mrf.mxu0
        %v552 = vadd.f32 0.0, %v551
        %v553 = vpop.f32.mrf.mxu0
        %554 = vdwg.mxu0
        %v555 = vsel %vm460, %v552, -1e+30
        %v556 = vsel %vm463, %v555, -inf
        %557 = vmax.xlane.f32.xlu0 %v556
        %v558 = vpop.xlane.xlu0 %557
        %v559 = vsub.f32 %v555, %v558
        %v560 = vmul.f32 %v559, 1.442695
        %v561 = vpow.pop %v560
        %v562 = vsel %vm463, %v561, 0.0
        %563 = vadd.xlane.f32.xlu0 %v562
        %v564 = vpop.xlane.xlu0 %563
        %v565 = vrcp.pop %v564
        %v566 = vmul.f32 %v561, %v565
        %v567 = vpack.c.bf16 %v566, %v566
        %568 = vrot.lane.b32.xlu0 %v533, 88
        %v569 = vpop.permute.xlu0 %568
        %v571 = vsel %vm463, %v567, 0
        %v574 = vsel %vm504, %v569, 0
        %576 = vmatpush.bf16.msra.mxu0 0
        %577 = vmatpush.bf16.msra.mxu0 0
        %578 = vmatpush.bf16.msra.mxu0 0
        %579 = vmatpush.bf16.msra.mxu0 0
        %580 = vmatpush.bf16.msra.mxu0 0
        %581 = vmatpush.bf16.msra.mxu0 0
        %582 = vmatpush.bf16.msra.mxu0 0
        %583 = vmatpush.bf16.msra.mxu0 %v574
        %584 = vmatmul.bf16.gmra.mxu0 %v571
        %v585 = vpop.f32.mrf.mxu0
        %v586 = vadd.f32 0.0, %v585
        %v587 = vpop.f32.mrf.mxu0
        %588 = vdwg.mxu0
        %v589 = vpack.c.bf16 %v586, %v586
        %591 = vrot.lane.b32.xlu0 %v589, 8
        %v592 = vpop.permute.xlu0 %591
        %vm594 = vcmask 126016
        %595 = vst.msk [vmem:[#allocation4] sm:$0xf] %vm594, %v592
        %v596 = vld [vmem:[#allocation3] sm:$0xf]
        %v597 = vld [vmem:[#allocation2] sm:$0xf]
        %v599 = vunpack.c.l.b16 %v596
        %v600 = vpack.c.b16 %v599, %v599
        %601 = vrot.lane.b32.xlu0 %v600, 112
        %v602 = vpop.permute.xlu0 %601
        %v604 = vunpack.c.l.b16 %v597
        %v605 = vpack.c.b16 %v604, %v604
        %606 = vrot.lane.b32.xlu0 %v605, 112
        %v607 = vpop.permute.xlu0 %606
        %v609 = vsel %vm463, %v602, 0
        %v612 = vsel %vm463, %v607, 0
        %614 = vmatpush.bf16.xpose.msra.mxu0 0
        %615 = vmatpush.bf16.xpose.msra.mxu0 0
        %616 = vmatpush.bf16.xpose.msra.mxu0 0
        %617 = vmatpush.bf16.xpose.msra.mxu0 0
        %618 = vmatpush.bf16.xpose.msra.mxu0 0
        %619 = vmatpush.bf16.xpose.msra.mxu0 0
        %620 = vmatpush.bf16.xpose.msra.mxu0 0
        %621 = vmatpush.bf16.xpose.msra.mxu0 %v612
        %622 = vmatmul.bf16.gmra.mxu0 %v609
        %v623 = vpop.f32.mrf.mxu0
        %v624 = vadd.f32 0.0, %v623
        %v625 = vpop.f32.mrf.mxu0
        %626 = vdwg.mxu0
        %v627 = vsel %vm460, %v624, -1e+30
        %v628 = vsel %vm463, %v627, -inf
        %629 = vmax.xlane.f32.xlu0 %v628
        %v630 = vpop.xlane.xlu0 %629
        %v631 = vsub.f32 %v627, %v630
        %v632 = vmul.f32 %v631, 1.442695
        %v633 = vpow.pop %v632
        %v634 = vsel %vm463, %v633, 0.0
        %635 = vadd.xlane.f32.xlu0 %v634
        %v636 = vpop.xlane.xlu0 %635
        %v637 = vrcp.pop %v636
        %v638 = vmul.f32 %v633, %v637
        %v639 = vpack.c.bf16 %v638, %v638
        %640 = vrot.lane.b32.xlu0 %v605, 80
        %v641 = vpop.permute.xlu0 %640
        %v643 = vsel %vm463, %v639, 0
        %v646 = vsel %vm504, %v641, 0
        %648 = vmatpush.bf16.msra.mxu0 0
        %649 = vmatpush.bf16.msra.mxu0 0
        %650 = vmatpush.bf16.msra.mxu0 0
        %651 = vmatpush.bf16.msra.mxu0 0
        %652 = vmatpush.bf16.msra.mxu0 0
        %653 = vmatpush.bf16.msra.mxu0 0
        %654 = vmatpush.bf16.msra.mxu0 0
        %655 = vmatpush.bf16.msra.mxu0 %v646
        %656 = vmatmul.bf16.gmra.mxu0 %v643
        %v657 = vpop.f32.mrf.mxu0
        %v658 = vadd.f32 0.0, %v657
        %v659 = vpop.f32.mrf.mxu0
        %660 = vdwg.mxu0
        %v661 = vpack.c.bf16 %v658, %v658
        %663 = vrot.lane.b32.xlu0 %v661, 16
        %v664 = vpop.permute.xlu0 %663
        %vm666 = vcmask 191616
        %667 = vst.msk [vmem:[#allocation4] sm:$0xf] %vm666, %v664
        %v668 = vld [vmem:[#allocation3] sm:$0xf]
        %v669 = vld [vmem:[#allocation2] sm:$0xf]
        %v671 = vunpack.c.l.b16 %v668
        %v672 = vpack.c.b16 %v671, %v671
        %673 = vrot.lane.b32.xlu0 %v672, 104
        %v674 = vpop.permute.xlu0 %673
        %v676 = vunpack.c.l.b16 %v669
        %v677 = vpack.c.b16 %v676, %v676
        %678 = vrot.lane.b32.xlu0 %v677, 104
        %v679 = vpop.permute.xlu0 %678
        %v681 = vsel %vm463, %v674, 0
        %v684 = vsel %vm463, %v679, 0
        %686 = vmatpush.bf16.xpose.msra.mxu0 0
        %687 = vmatpush.bf16.xpose.msra.mxu0 0
        %688 = vmatpush.bf16.xpose.msra.mxu0 0
        %689 = vmatpush.bf16.xpose.msra.mxu0 0
        %690 = vmatpush.bf16.xpose.msra.mxu0 0
        %691 = vmatpush.bf16.xpose.msra.mxu0 0
        %692 = vmatpush.bf16.xpose.msra.mxu0 0
        %693 = vmatpush.bf16.xpose.msra.mxu0 %v684
        %694 = vmatmul.bf16.gmra.mxu0 %v681
        %v695 = vpop.f32.mrf.mxu0
        %v696 = vadd.f32 0.0, %v695
        %v697 = vpop.f32.mrf.mxu0
        %698 = vdwg.mxu0
        %v699 = vsel %vm460, %v696, -1e+30
        %v700 = vsel %vm463, %v699, -inf
        %701 = vmax.xlane.f32.xlu0 %v700
        %v702 = vpop.xlane.xlu0 %701
        %v703 = vsub.f32 %v699, %v702
        %v704 = vmul.f32 %v703, 1.442695
        %v705 = vpow.pop %v704
        %v706 = vsel %vm463, %v705, 0.0
        %707 = vadd.xlane.f32.xlu0 %v706
        %v708 = vpop.xlane.xlu0 %707
        %v709 = vrcp.pop %v708
        %v710 = vmul.f32 %v705, %v709
        %v711 = vpack.c.bf16 %v710, %v710
        %712 = vrot.lane.b32.xlu0 %v677, 72
        %v713 = vpop.permute.xlu0 %712
        %v715 = vsel %vm463, %v711, 0
        %v718 = vsel %vm504, %v713, 0
        %720 = vmatpush.bf16.msra.mxu0 0
        %721 = vmatpush.bf16.msra.mxu0 0
        %722 = vmatpush.bf16.msra.mxu0 0
        %723 = vmatpush.bf16.msra.mxu0 0
        %724 = vmatpush.bf16.msra.mxu0 0
        %725 = vmatpush.bf16.msra.mxu0 0
        %726 = vmatpush.bf16.msra.mxu0 0
        %727 = vmatpush.bf16.msra.mxu0 %v718
        %728 = vmatmul.bf16.gmra.mxu0 %v715
        %v729 = vpop.f32.mrf.mxu0
        %v730 = vadd.f32 0.0, %v729
        %v731 = vpop.f32.mrf.mxu0
        %732 = vdwg.mxu0
        %v733 = vpack.c.bf16 %v730, %v730
        %735 = vrot.lane.b32.xlu0 %v733, 24
        %v736 = vpop.permute.xlu0 %735
        %vm738 = vcmask 257216
        %739 = vst.msk [vmem:[#allocation4] sm:$0xf] %vm738, %v736
        %v740 = vld [vmem:[#allocation4] sm:$0xf]
        %v741 = vld [vmem:[#allocation13] sm:$0xf]
        %v742 = vld [vmem:[#allocation13 + $0x4] sm:$0xf]
        %v743 = vld [vmem:[#allocation13 + $0x8] sm:$0xf]
        %v744 = vld [vmem:[#allocation13 + $0xc] sm:$0xf]
        %v745 = vld [vmem:[%s5] sm:$0x1]
        %v747 = vperm.slane %v745, 0
        %v753 = vunpack.c.l.b16 %v741
        %v754 = vunpack.c.l.b16 %v742
        %v755 = vunpack.c.l.b16 %v743
        %v756 = vunpack.c.l.b16 %v744
        %v757 = vpack.c.b16 %v754, %v753
        %v758 = vpack.c.b16 %v756, %v755
        %v762 = vsel %vm433, %v740, 0
        %764 = vmatpush.bf16.msra.mxu0 0
        %765 = vmatpush.bf16.msra.mxu0 0
        %766 = vmatpush.bf16.msra.mxu0 0
        %767 = vmatpush.bf16.msra.mxu0 0
        %768 = vmatpush.bf16.msra.mxu0 0
        %769 = vmatpush.bf16.msra.mxu0 0
        %770 = vmatpush.bf16.msra.mxu0 %v758
        %771 = vmatpush.bf16.msra.mxu0 %v757
        %772 = vmatmul.bf16.gmra.mxu0 %v762
        %v773 = vpop.f32.mrf.mxu0
        %v774 = vadd.f32 %v747, %v773
        %v775 = vpop.f32.mrf.mxu0
        %776 = vdwg.mxu0
        %777 = vst.msk [vmem:[%s373] sm:$0xff] %vm433, %v774
        %s778 = sand.u32 %s187, 1
        %s779 = scalar_lea.sflag [#allocation7], %s778
        %s780 = sand.u32 %s187, 1
        %s781 = smul.addr %s780, 8
        %s782 = scalar_lea.vmem [#allocation14], %s781
        // Predicated region
        $region69: #{tpu_custom_call.1} parent=43 // pred_check
          %p783 = pneg %p197
        $region70: #{tpu_custom_call.1} parent=43 // pred_check_branch
          %785 = sbr.rel (%p783) target = $region72
        $region71: #{tpu_custom_call.1} parent=43 // pred_region
          %787 = vsyncadd %s779, 0
          %s788 = sadd.s32 %s32, %s31
          %s789 = smul.addr %s788, 8
          %s790 = scalar_lea.hbm %s6, %s789
          %s792 = sshll.u32 %s782, 4
          %s793 = int_to_ptr.vmem [resolvable:$true] %s792
          %s794 = sshll.u32 %s790, 4
          %s795 = int_to_ptr.hbm [resolvable:$true] %s794
          %797 = dma.vmem_to_hbm [thread:$0]  %s793, 128, %s795, %s779
        $region72: #{tpu_custom_call.1} parent=43 // pred_fallthru
          _
      $region44: #{tpu_custom_call.1} parent=5 // pred_fallthru
        _
      %p798 = scmp.le.s32.totalorder 2, %s22
      // Predicated region
      $region73: #{tpu_custom_call.1} parent=5 // pred_check
        %p799 = pneg %p798
      $region74: #{tpu_custom_call.1} parent=5 // pred_check_branch
        %801 = sbr.rel (%p799) target = $region76
      $region75: #{tpu_custom_call.1} parent=5 // pred_region
        %s802 = ssub.s32 %s22, 2
        // Predicated region
        $region77: #{tpu_custom_call.1} parent=75 // pred_check
          %p803 = pneg %p203
        $region78: #{tpu_custom_call.1} parent=75 // pred_check_branch
          %805 = sbr.rel (%p803) target = $region80
        $region79: #{tpu_custom_call.1} parent=75 // pred_region
          %s806 = sand.u32 %s188, 1
          %s807 = scalar_lea.sflag [#allocation7], %s806
          %s808 = sand.u32 %s188, 1
          %s809 = smul.addr %s808, 8
          %s810 = scalar_lea.vmem [#allocation14], %s809
          %812 = dma.done %s807, 128
        $region80: #{tpu_custom_call.1} parent=75 // pred_fallthru
          _
      $region76: #{tpu_custom_call.1} parent=5 // pred_fallthru
        _
    $region6: #{tpu_custom_call.1} parent=1 // loop_footer
      %s26 = sadd.s32 1, %s22
    $region7: #{tpu_custom_call.1} parent=1 // loop_footer_branch
      %21 = sbr.rel target = $region3
    $region8: #{tpu_custom_call.1} parent=1 // loop_exit
      _
    %813 = vsyncpa [#allocation6], 1
    %s814 = scalar_lea.sflag [#allocation6], 1
    %815 = vsyncpa %s814, 1
    %816 = vsyncpa [#allocation9], 1
    %s817 = scalar_lea.sflag [#allocation9], 1
    %818 = vsyncpa %s817, 1
    %819 = vsyncpa [#allocation12], 1
    %820 = vsyncpa [#allocation7], 1
    %s821 = scalar_lea.sflag [#allocation7], 1
    %822 = vsyncpa %s821, 1

</llo_original>
